<compile_context>
chip_gen: v5e
topology: v5e:2x2
jax: 0.10.0
libtpu: 0.0.40
codegen_flags: <defaults>
</compile_context>

<pallas_src>
import jax
import jax.numpy as jnp
from jax.experimental import pallas as pl
from jax.experimental.pallas import tpu as pltpu

_LANE_BLOCK = 128                    # feature tile width (lane-dense stores)
_VMEM_LIMIT = 32 * 1024 * 1024       # explicit cap; safe on v5e/v6e/v7x


def _round_up(a: int, b: int) -> int:
    return (a + b - 1) // b * b


# ---------------------------------------------------------------------------
# Pass 1: per-feature sum / sum-of-squares of y = x @ W + b, per group.
# grid = (feature_tiles [parallel], row_tiles [arbitrary, reduction]).
# gid[t] (scalar prefetch) selects the node/edge weight slab for row tile t;
# nvalid[t] masks zero-padded rows out of the statistics.
# ---------------------------------------------------------------------------
def _stats_kernel(gid_ref, nvalid_ref, x_ref, w_ref, b_ref, stats_ref):
    t = pl.program_id(1)

    @pl.when(t == 0)
    def _init():
        stats_ref[...] = jnp.zeros_like(stats_ref)

    g = gid_ref[t]
    nvalid = nvalid_ref[t]

    y = jnp.dot(x_ref[...], w_ref[0], preferred_element_type=jnp.float32)
    y = y + b_ref[0]

    row = jax.lax.broadcasted_iota(jnp.int32, y.shape, 0)
    ym = jnp.where(row < nvalid, y, 0.0)

    s = jnp.sum(ym, axis=0, keepdims=True)         # (1, LANE_BLOCK)
    sq = jnp.sum(ym * ym, axis=0, keepdims=True)   # (1, LANE_BLOCK)
    upd = jnp.concatenate([s, sq], axis=0)         # (2, LANE_BLOCK)

    @pl.when(g == 0)
    def _acc_node():
        stats_ref[0] += upd

    @pl.when(g != 0)
    def _acc_edge():
        stats_ref[1] += upd


# ---------------------------------------------------------------------------
# Pass 2: o = (x @ W) * scale + shift   (linear bias + BN folded into shift).
# Fully parallel grid; output stores are 128-lane dense.
# ---------------------------------------------------------------------------
def _apply_kernel(gid_ref, x_ref, w_ref, ss_ref, o_ref):
    del gid_ref  # only consumed by the index maps
    y = jnp.dot(x_ref[...], w_ref[0], preferred_element_type=jnp.float32)
    scale = ss_ref[0, 0:1, :]
    shift = ss_ref[0, 1:2, :]
    o_ref[...] = (y * scale + shift).astype(o_ref.dtype)


def feature_encoder_forward(x, edge_attr, params, *, eps=1e-5,
                            block_rows=1024, out_dtype=jnp.float32):
    """FeatureEncoder.forward: (Linear + BatchNorm1d) on node and edge features."""
    n_node, k_node = x.shape
    n_edge, k_edge = edge_attr.shape
    d_node = params["node_w"].shape[1]
    d_edge = params["edge_w"].shape[1]

    f32 = jnp.float32
    d_pad = _round_up(max(d_node, d_edge), _LANE_BLOCK)   # lane-dense feature width
    k_pad = max(k_node, k_edge)                           # shared contraction width
    num_f = d_pad // _LANE_BLOCK

    tm = min(int(block_rows), _round_up(max(n_node, n_edge), 8))
    tm = max(_round_up(tm, 8), 8)

    rows_node = _round_up(n_node, tm)
    rows_edge = _round_up(n_edge, tm)
    tiles_node = rows_node // tm
    tiles_edge = rows_edge // tm
    num_t = tiles_node + tiles_edge

    def pad2(a, rows, cols):
        return jnp.pad(a.astype(f32),
                       ((0, rows - a.shape[0]), (0, cols - a.shape[1])))

    def pad1(v, fill):
        return jnp.pad(v.astype(f32), (0, d_pad - v.shape[0]),
                       constant_values=fill)

    # Node rows then edge rows, each zero-padded to a multiple of the row tile.
    x_all = jnp.concatenate([pad2(x, rows_node, k_pad),
                             pad2(edge_attr, rows_edge, k_pad)], axis=0)

    # Stacked per-group parameters (group 0 = nodes, group 1 = edges).
    w_all = jnp.stack([pad2(params["node_w"], k_pad, d_pad),
                       pad2(params["edge_w"], k_pad, d_pad)], axis=0)        # (2, K, D)
    b_all = jnp.stack([pad1(params["node_b"], 0.0),
                       pad1(params["edge_b"], 0.0)], axis=0)[:, None, :]     # (2, 1, D)
    gamma_all = jnp.stack([pad1(params["node_bn_gamma"], 1.0),
                           pad1(params["edge_bn_gamma"], 1.0)], axis=0)      # (2, D)
    beta_all = jnp.stack([pad1(params["node_bn_beta"], 0.0),
                          pad1(params["edge_bn_beta"], 0.0)], axis=0)        # (2, D)

    # Per-row-tile metadata for scalar prefetch.
    gid = jnp.concatenate([jnp.zeros((tiles_node,), jnp.int32),
                           jnp.ones((tiles_edge,), jnp.int32)])

    def _tile_valid(n, ntiles):
        starts = jnp.arange(ntiles, dtype=jnp.int32) * tm
        return jnp.clip(n - starts, 0, tm).astype(jnp.int32)

    nvalid = jnp.concatenate([_tile_valid(n_node, tiles_node),
                              _tile_valid(n_edge, tiles_edge)])

    # ---------------- pass 1: batch statistics (row reduction) ----------------
    stats = pl.pallas_call(
        _stats_kernel,
        out_shape=jax.ShapeDtypeStruct((2, 2, d_pad), f32),
        grid_spec=pltpu.PrefetchScalarGridSpec(
            num_scalar_prefetch=2,
            grid=(num_f, num_t),
            in_specs=[
                pl.BlockSpec((tm, k_pad), lambda f, t, g, nv: (t, 0)),
                pl.BlockSpec((1, k_pad, _LANE_BLOCK),
                             lambda f, t, g, nv: (g[t], 0, f)),
                pl.BlockSpec((1, 1, _LANE_BLOCK),
                             lambda f, t, g, nv: (g[t], 0, f)),
            ],
            out_specs=pl.BlockSpec((2, 2, _LANE_BLOCK),
                                   lambda f, t, g, nv: (0, 0, f)),
        ),
        compiler_params=pltpu.CompilerParams(
            dimension_semantics=("parallel", "arbitrary"),
            vmem_limit_bytes=_VMEM_LIMIT,
        ),
    )(gid, nvalid, x_all, w_all, b_all)

    # -------- fold BN (and the linear bias) into per-feature scale / shift --------
    counts = jnp.array([n_node, n_edge], f32)[:, None]            # (2, 1)
    mean = stats[:, 0, :] / counts                                # mean of xW + b
    var = jnp.maximum(stats[:, 1, :] / counts - mean * mean, 0.0)
    inv_std = jax.lax.rsqrt(var + eps)
    scale = gamma_all * inv_std
    shift = beta_all + (b_all[:, 0, :] - mean) * scale
    ss_all = jnp.stack([scale, shift], axis=1)                    # (2, 2, D)

    # ---------------- pass 2: apply (fully parallel, lane-dense) ----------------
    out_all = pl.pallas_call(
        _apply_kernel,
        out_shape=jax.ShapeDtypeStruct((rows_node + rows_edge, d_pad), out_dtype),
        grid_spec=pltpu.PrefetchScalarGridSpec(
            num_scalar_prefetch=1,
            grid=(num_f, num_t),
            in_specs=[
                pl.BlockSpec((tm, k_pad), lambda f, t, g: (t, 0)),
                pl.BlockSpec((1, k_pad, _LANE_BLOCK),
                             lambda f, t, g: (g[t], 0, f)),
                pl.BlockSpec((1, 2, _LANE_BLOCK),
                             lambda f, t, g: (g[t], 0, f)),
            ],
            out_specs=pl.BlockSpec((tm, _LANE_BLOCK), lambda f, t, g: (t, f)),
        ),
        compiler_params=pltpu.CompilerParams(
            dimension_semantics=("parallel", "parallel"),
            vmem_limit_bytes=_VMEM_LIMIT,
        ),
    )(gid, x_all, w_all, ss_all)

    x_out = out_all[:n_node, :d_node]
    e_out = out_all[rows_node:rows_node + n_edge, :d_edge]
    return x_out, e_out


def init_params(key, node_dim_in, edge_dim_in, dim_inner, dim_edge):
    """Deterministic parameter init (shapes follow the PyTorch module)."""
    k1, k2, k3, k4 = jax.random.split(key, 4)
    node_w = (jax.random.normal(k1, (node_dim_in, dim_inner), jnp.float32)
              * (1.0 / jnp.sqrt(node_dim_in)))
    node_b = jax.random.normal(k2, (dim_inner,), jnp.float32) * 0.01
    edge_w = (jax.random.normal(k3, (edge_dim_in, dim_edge), jnp.float32)
              * (1.0 / jnp.sqrt(edge_dim_in)))
    edge_b = jax.random.normal(k4, (dim_edge,), jnp.float32) * 0.01
    return {
        "node_w": node_w,
        "node_b": node_b,
        "node_bn_gamma": jnp.ones((dim_inner,), jnp.float32),
        "node_bn_beta": jnp.zeros((dim_inner,), jnp.float32),
        "edge_w": edge_w,
        "edge_b": edge_b,
        "edge_bn_gamma": jnp.ones((dim_edge,), jnp.float32),
        "edge_bn_beta": jnp.zeros((dim_edge,), jnp.float32),
    }


def _reference(x, edge_attr, params, eps=1e-5):
    """Pure-JAX reference (Linear -> training-mode BatchNorm1d)."""
    def one(v, w, b, g, bt):
        y = v @ w + b
        mean = y.mean(axis=0, keepdims=True)
        var = ((y - mean) ** 2).mean(axis=0, keepdims=True)
        return (y - mean) / jnp.sqrt(var + eps) * g + bt

    return (one(x, params["node_w"], params["node_b"],
                params["node_bn_gamma"], params["node_bn_beta"]),
            one(edge_attr, params["edge_w"], params["edge_b"],
                params["edge_bn_gamma"], params["edge_bn_beta"]))


if __name__ == "__main__":
    # Small, module-consistent shapes:
    #   num_nodes=16, node feature dim_in=4 -> dim_inner=32
    #   num_edges=24, edge feature dim_in=4 -> dim_edge=32
    # TODO(synk): the registry-based encoder dispatch (cfg.dataset.*_encoder_name)
    # is concretized here to the Linear + BatchNorm1dNode variant.
    num_nodes, node_dim_in = 16, 4
    num_edges, edge_dim_in = 24, 4
    dim_inner, dim_edge = 32, 32

    key = jax.random.PRNGKey(0)
    kx, ke, kp = jax.random.split(key, 3)
    x = jax.random.normal(kx, (num_nodes, node_dim_in), jnp.float32)
    edge_attr = jax.random.normal(ke, (num_edges, edge_dim_in), jnp.float32)
    params = init_params(kp, node_dim_in, edge_dim_in, dim_inner, dim_edge)

    # block_rows=8 forces several row tiles so the two-phase reduction path is
    # exercised even at demo scale (defaults to 1024-row tiles for real graphs).
    x_out, e_out = feature_encoder_forward(x, edge_attr, params, block_rows=8)
    jax.block_until_ready((x_out, e_out))

    x_ref, e_ref = _reference(x, edge_attr, params)
    assert x_out.shape == (num_nodes, dim_inner)
    assert e_out.shape == (num_edges, dim_edge)
    assert jnp.allclose(x_out, x_ref, atol=1e-3, rtol=1e-3)
    assert jnp.allclose(e_out, e_ref, atol=1e-3, rtol=1e-3)

    print("KERNEL_OK")
</pallas_src>

<mosaic_0001>
module attributes {stable_mosaic.version = 11 : i64} {
  func.func @_stats_kernel(%arg0: i32, %arg1: i32, %arg2: memref<5xi32, #tpu.memory_space<smem>>, %arg3: memref<5xi32, #tpu.memory_space<smem>>, %arg4: memref<8x4xf32, #tpu.memory_space<vmem>>, %arg5: memref<1x4x128xf32, #tpu.memory_space<vmem>>, %arg6: memref<1x1x128xf32, #tpu.memory_space<vmem>>, %arg7: memref<2x2x128xf32, #tpu.memory_space<vmem>>) attributes {dimension_semantics = [#tpu.dimension_semantics<parallel>, #tpu.dimension_semantics<arbitrary>], iteration_bounds = array<i64: 1, 5>, scalar_prefetch = 2 : i64, scratch_operands = 0 : i64, tpu.core_type = #tpu.core_type<tc>, window_params = [{transform_indices = @transform_0, window_bounds = array<i64: 8, 4>}, {transform_indices = @transform_1, window_bounds = array<i64: 1, 4, 128>}, {transform_indices = @transform_2, window_bounds = array<i64: 1, 1, 128>}, {transform_indices = @transform_3, window_bounds = array<i64: 2, 2, 128>}]} {
    %c0_i32 = arith.constant 0 : i32
    %0 = arith.cmpi eq, %arg1, %c0_i32 : i32
    %1 = arith.extui %0 : i1 to i32
    %c0_i32_0 = arith.constant 0 : i32
    %2 = arith.cmpi ne, %1, %c0_i32_0 : i32
    scf.if %2 {
      %cst_15 = arith.constant 0.000000e+00 : f32
      %32 = vector.broadcast %cst_15 : f32 to vector<2x2x128xf32>
      %c0_16 = arith.constant 0 : index
      %c0_17 = arith.constant 0 : index
      %c0_18 = arith.constant 0 : index
      %33 = vector.load %arg7[%c0_16, %c0_17, %c0_18] : memref<2x2x128xf32, #tpu.memory_space<vmem>>, vector<2x2x128xf32>
      tpu.vector_store %arg7[%c0_16, %c0_17, %c0_18], %32 {strides = array<i32>} : memref<2x2x128xf32, #tpu.memory_space<vmem>>, vector<2x2x128xf32>,
    } else {
    }
    %3 = arith.index_cast %arg1 : i32 to index
    %4 = memref.load %arg2[%3] : memref<5xi32, #tpu.memory_space<smem>>
    %5 = arith.index_cast %arg1 : i32 to index
    %6 = memref.load %arg3[%5] : memref<5xi32, #tpu.memory_space<smem>>
    %c0 = arith.constant 0 : index
    %c0_1 = arith.constant 0 : index
    %7 = vector.load %arg4[%c0, %c0_1] : memref<8x4xf32, #tpu.memory_space<vmem>>, vector<8x4xf32>
    %c0_2 = arith.constant 0 : index
    %c0_3 = arith.constant 0 : index
    %c0_4 = arith.constant 0 : index
    %8 = vector.load %arg5[%c0_2, %c0_3, %c0_4] : memref<1x4x128xf32, #tpu.memory_space<vmem>>, vector<1x4x128xf32>
    %9 = vector.shape_cast %8 : vector<1x4x128xf32> to vector<4x128xf32>
    %cst = arith.constant dense<0.000000e+00> : vector<8x128xf32>
    %10 = tpu.matmul %7, %9, %cst {dimension_numbers = #tpu.dot_dimension_numbers<[1], [0], [0], [1], [0, 0, 1, 1], [], []>} : vector<8x4xf32>, vector<4x128xf32>, vector<8x128xf32> -> vector<8x128xf32>
    %c0_5 = arith.constant 0 : index
    %c0_6 = arith.constant 0 : index
    %c0_7 = arith.constant 0 : index
    %11 = vector.load %arg6[%c0_5, %c0_6, %c0_7] : memref<1x1x128xf32, #tpu.memory_space<vmem>>, vector<1x1x128xf32>
    %12 = vector.shape_cast %11 : vector<1x1x128xf32> to vector<1x128xf32>
    %13 = vector.broadcast %12 : vector<1x128xf32> to vector<8x128xf32>
    %14 = arith.addf %10, %13 : vector<8x128xf32>
    %15 = tpu.iota {dimensions = array<i32: 0>} : vector<8x128xi32>
    %16 = vector.broadcast %6 : i32 to vector<8x128xi32>
    %17 = arith.cmpi slt, %15, %16 : vector<8x128xi32>
    %cst_8 = arith.constant 0.000000e+00 : f32
    %18 = vector.broadcast %cst_8 : f32 to vector<8x128xf32>
    %19 = arith.select %17, %14, %18 : vector<8x128xi1>, vector<8x128xf32>
    %cst_9 = arith.constant dense<0.000000e+00> : vector<128xf32>
    %20 = vector.multi_reduction <add>, %19, %cst_9 [0] : vector<8x128xf32> to vector<128xf32>
    %21 = vector.shape_cast %20 : vector<128xf32> to vector<1x128xf32>
    %22 = arith.mulf %19, %19 : vector<8x128xf32>
    %cst_10 = arith.constant dense<0.000000e+00> : vector<128xf32>
    %23 = vector.multi_reduction <add>, %22, %cst_10 [0] : vector<8x128xf32> to vector<128xf32>
    %24 = vector.shape_cast %23 : vector<128xf32> to vector<1x128xf32>
    %25 = tpu.concatenate %21, %24 in 0 : vector<1x128xf32>, vector<1x128xf32> -> vector<2x128xf32>
    %c0_i32_11 = arith.constant 0 : i32
    %26 = arith.cmpi eq, %4, %c0_i32_11 : i32
    %27 = arith.extui %26 : i1 to i32
    %c0_i32_12 = arith.constant 0 : i32
    %28 = arith.cmpi ne, %27, %c0_i32_12 : i32
    scf.if %28 {
      %c0_15 = arith.constant 0 : index
      %c0_16 = arith.constant 0 : index
      %c0_17 = arith.constant 0 : index
      %32 = vector.load %arg7[%c0_15, %c0_16, %c0_17] : memref<2x2x128xf32, #tpu.memory_space<vmem>>, vector<1x2x128xf32>
      %33 = vector.shape_cast %32 : vector<1x2x128xf32> to vector<2x128xf32>
      %34 = arith.addf %33, %25 : vector<2x128xf32>
      %c0_18 = arith.constant 0 : index
      %c0_19 = arith.constant 0 : index
      %c0_20 = arith.constant 0 : index
      %35 = vector.load %arg7[%c0_18, %c0_19, %c0_20] : memref<2x2x128xf32, #tpu.memory_space<vmem>>, vector<1x2x128xf32>
      %36 = vector.shape_cast %35 : vector<1x2x128xf32> to vector<2x128xf32>
      %37 = vector.shape_cast %34 : vector<2x128xf32> to vector<1x2x128xf32>
      tpu.vector_store %arg7[%c0_18, %c0_19, %c0_20], %37 {strides = array<i32>} : memref<2x2x128xf32, #tpu.memory_space<vmem>>, vector<1x2x128xf32>,
    } else {
    }
    %c0_i32_13 = arith.constant 0 : i32
    %29 = arith.cmpi ne, %4, %c0_i32_13 : i32
    %30 = arith.extui %29 : i1 to i32
    %c0_i32_14 = arith.constant 0 : i32
    %31 = arith.cmpi ne, %30, %c0_i32_14 : i32
    scf.if %31 {
      %c1 = arith.constant 1 : index
      %c0_15 = arith.constant 0 : index
      %c0_16 = arith.constant 0 : index
      %32 = vector.load %arg7[%c1, %c0_15, %c0_16] : memref<2x2x128xf32, #tpu.memory_space<vmem>>, vector<1x2x128xf32>
      %33 = vector.shape_cast %32 : vector<1x2x128xf32> to vector<2x128xf32>
      %34 = arith.addf %33, %25 : vector<2x128xf32>
      %c1_17 = arith.constant 1 : index
      %c0_18 = arith.constant 0 : index
      %c0_19 = arith.constant 0 : index
      %35 = vector.load %arg7[%c1_17, %c0_18, %c0_19] : memref<2x2x128xf32, #tpu.memory_space<vmem>>, vector<1x2x128xf32>
      %36 = vector.shape_cast %35 : vector<1x2x128xf32> to vector<2x128xf32>
      %37 = vector.shape_cast %34 : vector<2x128xf32> to vector<1x2x128xf32>
      tpu.vector_store %arg7[%c1_17, %c0_18, %c0_19], %37 {strides = array<i32>} : memref<2x2x128xf32, #tpu.memory_space<vmem>>, vector<1x2x128xf32>,
    } else {
    }
    return
  }
  func.func @transform_0(%arg0: i32, %arg1: i32, %arg2: memref<5xi32, #tpu.memory_space<smem>>, %arg3: memref<5xi32, #tpu.memory_space<smem>>) -> (i32, i32) {
    %c0_i32 = arith.constant 0 : i32
    %c0_i32_0 = arith.constant 0 : i32
    return %arg1, %c0_i32 : i32, i32
  }
  func.func @transform_1(%arg0: i32, %arg1: i32, %arg2: memref<5xi32, #tpu.memory_space<smem>>, %arg3: memref<5xi32, #tpu.memory_space<smem>>) -> (i32, i32, i32) {
    %0 = arith.index_cast %arg1 : i32 to index
    %1 = memref.load %arg2[%0] : memref<5xi32, #tpu.memory_space<smem>>
    %c0_i32 = arith.constant 0 : i32
    %c0_i32_0 = arith.constant 0 : i32
    return %1, %c0_i32, %arg0 : i32, i32, i32
  }
  func.func @transform_2(%arg0: i32, %arg1: i32, %arg2: memref<5xi32, #tpu.memory_space<smem>>, %arg3: memref<5xi32, #tpu.memory_space<smem>>) -> (i32, i32, i32) {
    %0 = arith.index_cast %arg1 : i32 to index
    %1 = memref.load %arg2[%0] : memref<5xi32, #tpu.memory_space<smem>>
    %c0_i32 = arith.constant 0 : i32
    %c0_i32_0 = arith.constant 0 : i32
    return %1, %c0_i32, %arg0 : i32, i32, i32
  }
  func.func @transform_3(%arg0: i32, %arg1: i32, %arg2: memref<5xi32, #tpu.memory_space<smem>>, %arg3: memref<5xi32, #tpu.memory_space<smem>>) -> (i32, i32, i32) {
    %c0_i32 = arith.constant 0 : i32
    %c0_i32_0 = arith.constant 0 : i32
    %c0_i32_1 = arith.constant 0 : i32
    return %c0_i32, %c0_i32_0, %arg0 : i32, i32, i32
  }
}

</mosaic_0001>

<llo_original>
// kernel: tpu_custom_call.1
$region0: #{tpu_custom_call.1}
  #allocation0 [shape = 'u32[]', space=smem, size = 0x4, offset = 0x4, fixed_abs, tag = 'smem constant byte address 0x4 - core index']
  #allocation1 [shape = 'u32[72,128]{1,0:T(1,128)}', space=vmem, size = 0x9000, scoped, tag = 'internal scratch']
  #allocation2 [shape = 's32[1]{0}', space=sflag, size = 0x4, scoped, tag = 'scoped memory for tpu_custom_call.1']
  #allocation3 [shape = 'u8[512]{0}', space=smem, size = 0x200, scoped, tag = 'prefetched SMEM operand 0']
  #allocation4 [shape = 'u8[512]{0}', space=smem, size = 0x200, scoped, tag = 'prefetched SMEM operand 1']
  %s0 = inlined_call_operand.vmem [shape: s32[5], index: 0, kind: input, shape index: {}]
  %s1 = inlined_call_operand.vmem [shape: s32[5], index: 1, kind: input, shape index: {}]
  %s2 = inlined_call_operand.vmem [shape: f32[40,4], index: 2, kind: input, shape index: {}]
  %s3 = inlined_call_operand.vmem [shape: f32[2,4,128], index: 3, kind: input, shape index: {}]
  %s4 = inlined_call_operand.vmem [shape: f32[2,1,128], index: 4, kind: input, shape index: {}]
  %s5 = inlined_call_operand.hbm [shape: f32[2,2,128], index: 5, kind: output, shape index: {}]
  %s6 = sld [smem:[#allocation0]]
  $region57: #{tpu_custom_call.1} parent=0
    _
  %s8 = ssub.s32 1, %s6
  %s9 = scalar_select 0, %s8, %s6
  %s11 = sshll.u32 %s0, 4
  %s12 = int_to_ptr.vmem [resolvable:$true] %s11
  %14 = dma.vmem_to_smem %s12, 16, [#allocation3], [#allocation2]
  %s16 = sshll.u32 %s1, 4
  %s17 = int_to_ptr.vmem [resolvable:$true] %s16
  %19 = dma.vmem_to_smem %s17, 16, [#allocation4], [#allocation2]
  %21 = dma.done [#allocation2], 32
  %22 = sfence
  $region1: #{tpu_custom_call.1} parent=0
    #allocation5 [shape = 'u8[2048]{0}', space=vmem, size = 0x800, scoped, tag = 'output window, operand 0, single buffered']
    #allocation6 [shape = 's32[2]{0}', space=sflag, size = 0x8, scoped, tag = 'scoped memory for tpu_custom_call.1']
    %23 = vsyncpa [#allocation6], 0
    loop: start=0, step=1, limit=7
    $region2: #{tpu_custom_call.1} parent=1 // loop_pre_header
      _
    $region3: #{tpu_custom_call.1} parent=1 // loop_header
      %s25 = sphi 0, %s29
      %p26 = scmp.ge.s32.totalorder %s25, 7
      %s32 = sphi 0, %s44
      %s33 = sphi 0, %s40
      %s34 = sphi 0, %s32
      %s35 = sphi 0, %s33
      %s36 = sphi 0, %s34
      %s37 = sphi 0, %s35
      %s47 = sphi 0, %s49
      %s50 = sphi 0, %s47
      %s51 = sphi 0, %s50
      %s67 = sphi 0, %s51
      %s77 = sphi 0, %s79
      %s80 = sphi 0, %s77
      %s81 = sphi 0, %s80
      %s97 = sphi 0, %s81
      %s107 = sphi 0, %s109
      %s110 = sphi 0, %s107
      %s111 = sphi 0, %s110
      %s127 = sphi 0, %s111
      %s133 = sphi 0, %s135
      %s136 = sphi 0, %s133
      %s137 = sphi 0, %s136
      %s153 = sphi 0, %s137
    $region4: #{tpu_custom_call.1} parent=1 // loop_header_branch
      %28 = sbr.rel (%p26) target = $region8
    $region5: #{tpu_custom_call.1} parent=1 // loop_body
      %s30 = ssub.s32 %s25, 1
      %s31 = ssub.s32 %s25, 2
      %s38 = sadd.s32 1, %s33
      %p39 = scmp.ge.s32.totalorder %s38, 5
      %s40 = scalar_select %p39, 0, %s38
      %s41 = sadd.s32 1, %s32
      %s42 = scalar_select %p39, %s41, %s32
      %p43 = scmp.ge.s32.totalorder %s42, 1
      %s44 = scalar_select %p43, 0, %s42
      %s45 = ssub.s32 %s33, %s40
      %p46 = scmp.eq.s32.totalorder %s45, 0
      %s48 = sadd.s32 %s47, 1
      %s49 = scalar_select %p46, %s47, %s48
      %p52 = pneg %p46
      %p53 = scmp.eq.s32.totalorder %s25, 4
      %p54 = por %p52, %p53
      %p55 = scmp.ne.s32.totalorder %s47, %s50
      %p56 = scmp.eq.s32.totalorder %s25, 0
      %p57 = por %p55, %p56
      %p58 = scmp.ne.s32.totalorder %s47, %s50
      %p59 = scmp.eq.s32.totalorder %s30, 4
      %p60 = por %p58, %p59
      %p61 = scmp.ne.s32.totalorder %s50, %s51
      %p62 = scmp.eq.s32.totalorder %s30, 0
      %p63 = por %p61, %p62
      %p64 = scmp.ne.s32.totalorder %s50, %s51
      %p65 = scmp.eq.s32.totalorder %s31, 4
      %p66 = por %p64, %p65
      %p68 = scmp.ne.s32.totalorder %s51, %s67
      %p69 = scmp.eq.s32.totalorder %s31, 0
      %p70 = por %p68, %p69
      %s71 = sld [smem:[#allocation3 + %s33]]
      %s72 = sld [smem:[#allocation3 + %s40]]
      %s73 = ssub.s32 %s71, %s72
      %s74 = ssub.s32 %s32, %s44
      %s75 = sor.u32 %s73, %s74
      %p76 = scmp.eq.s32.totalorder %s75, 0
      %s78 = sadd.s32 %s77, 1
      %s79 = scalar_select %p76, %s77, %s78
      %p82 = pneg %p76
      %p83 = scmp.eq.s32.totalorder %s25, 4
      %p84 = por %p82, %p83
      %p85 = scmp.ne.s32.totalorder %s77, %s80
      %p86 = scmp.eq.s32.totalorder %s25, 0
      %p87 = por %p85, %p86
      %p88 = scmp.ne.s32.totalorder %s77, %s80
      %p89 = scmp.eq.s32.totalorder %s30, 4
      %p90 = por %p88, %p89
      %p91 = scmp.ne.s32.totalorder %s80, %s81
      %p92 = scmp.eq.s32.totalorder %s30, 0
      %p93 = por %p91, %p92
      %p94 = scmp.ne.s32.totalorder %s80, %s81
      %p95 = scmp.eq.s32.totalorder %s31, 4
      %p96 = por %p94, %p95
      %p98 = scmp.ne.s32.totalorder %s81, %s97
      %p99 = scmp.eq.s32.totalorder %s31, 0
      %p100 = por %p98, %p99
      %s101 = sld [smem:[#allocation3 + %s33]]
      %s102 = sld [smem:[#allocation3 + %s40]]
      %s103 = ssub.s32 %s101, %s102
      %s104 = ssub.s32 %s32, %s44
      %s105 = sor.u32 %s103, %s104
      %p106 = scmp.eq.s32.totalorder %s105, 0
      %s108 = sadd.s32 %s107, 1
      %s109 = scalar_select %p106, %s107, %s108
      %p112 = pneg %p106
      %p113 = scmp.eq.s32.totalorder %s25, 4
      %p114 = por %p112, %p113
      %p115 = scmp.ne.s32.totalorder %s107, %s110
      %p116 = scmp.eq.s32.totalorder %s25, 0
      %p117 = por %p115, %p116
      %p118 = scmp.ne.s32.totalorder %s107, %s110
      %p119 = scmp.eq.s32.totalorder %s30, 4
      %p120 = por %p118, %p119
      %p121 = scmp.ne.s32.totalorder %s110, %s111
      %p122 = scmp.eq.s32.totalorder %s30, 0
      %p123 = por %p121, %p122
      %p124 = scmp.ne.s32.totalorder %s110, %s111
      %p125 = scmp.eq.s32.totalorder %s31, 4
      %p126 = por %p124, %p125
      %p128 = scmp.ne.s32.totalorder %s111, %s127
      %p129 = scmp.eq.s32.totalorder %s31, 0
      %p130 = por %p128, %p129
      %s131 = ssub.s32 %s32, %s44
      %p132 = scmp.eq.s32.totalorder %s131, 0
      %s134 = sadd.s32 %s133, 1
      %s135 = scalar_select %p132, %s133, %s134
      %p138 = pneg %p132
      %p139 = scmp.eq.s32.totalorder %s25, 4
      %p140 = por %p138, %p139
      %p141 = scmp.ne.s32.totalorder %s133, %s136
      %p142 = scmp.eq.s32.totalorder %s25, 0
      %p143 = por %p141, %p142
      %p144 = scmp.ne.s32.totalorder %s133, %s136
      %p145 = scmp.eq.s32.totalorder %s30, 4
      %p146 = por %p144, %p145
      %p147 = scmp.ne.s32.totalorder %s136, %s137
      %p148 = scmp.eq.s32.totalorder %s30, 0
      %p149 = por %p147, %p148
      %p150 = scmp.ne.s32.totalorder %s136, %s137
      %p151 = scmp.eq.s32.totalorder %s31, 4
      %p152 = por %p150, %p151
      %p154 = scmp.ne.s32.totalorder %s137, %s153
      %p155 = scmp.eq.s32.totalorder %s31, 0
      %p156 = por %p154, %p155
      %p157 = scmp.le.s32.totalorder 1, %s25
      %p158 = scmp.lt.s32.totalorder %s25, 6
      %p159 = pnand %p157, %p158
      %p160 = pneg %p159
      // Predicated region
      $region9: #{tpu_custom_call.1} parent=5 // pred_check
        _
      $region10: #{tpu_custom_call.1} parent=5 // pred_check_branch
        %162 = sbr.rel (%p159) target = $region12
      $region11: #{tpu_custom_call.1} parent=5 // pred_region
        %s163 = ssub.s32 %s25, 1
      $region12: #{tpu_custom_call.1} parent=5 // pred_fallthru
        _
      %p164 = scmp.lt.s32.totalorder %s25, 5
      // Predicated region
      $region13: #{tpu_custom_call.1} parent=5 // pred_check
        %p165 = pneg %p164
      $region14: #{tpu_custom_call.1} parent=5 // pred_check_branch
        %167 = sbr.rel (%p165) target = $region16
      $region15: #{tpu_custom_call.1} parent=5 // pred_region
        // Predicated region
        $region17: #{tpu_custom_call.1} parent=15 // pred_check
          %p168 = pneg %p57
        $region18: #{tpu_custom_call.1} parent=15 // pred_check_branch
          %170 = sbr.rel (%p168) target = $region20
        $region19: #{tpu_custom_call.1} parent=15 // pred_region
          %p171 = scmp.lt.s32.totalorder %s33, 4
          %s172 = scalar_select %p171, %s33, 4
          %s173 = smul.addr %s172, 8
          %s174 = scalar_lea.vmem %s2, %s173
        $region20: #{tpu_custom_call.1} parent=15 // pred_fallthru
          _
        // Predicated region
        $region21: #{tpu_custom_call.1} parent=15 // pred_check
          %p175 = pneg %p87
        $region22: #{tpu_custom_call.1} parent=15 // pred_check_branch
          %177 = sbr.rel (%p175) target = $region24
        $region23: #{tpu_custom_call.1} parent=15 // pred_region
          %s178 = sld [smem:[#allocation3 + %s33]]
          %p179 = scmp.lt.s32.totalorder %s178, 1
          %s180 = scalar_select %p179, %s178, 1
          %p181 = scmp.lt.s32.totalorder %s32, 0
          %s182 = scalar_select %p181, %s32, 0
          %s183 = sadd.s32 %s182, %s180
          %s184 = smul.addr %s183, 4
          %s185 = scalar_lea.vmem %s3, %s184
          %s186 = sld [smem:[#allocation3 + %s33]]
        $region24: #{tpu_custom_call.1} parent=15 // pred_fallthru
          _
        // Predicated region
        $region25: #{tpu_custom_call.1} parent=15 // pred_check
          %p187 = pneg %p117
        $region26: #{tpu_custom_call.1} parent=15 // pred_check_branch
          %189 = sbr.rel (%p187) target = $region28
        $region27: #{tpu_custom_call.1} parent=15 // pred_region
          %s190 = sld [smem:[#allocation3 + %s33]]
          %p191 = scmp.lt.s32.totalorder %s190, 1
          %s192 = scalar_select %p191, %s190, 1
          %p193 = scmp.lt.s32.totalorder %s32, 0
          %s194 = scalar_select %p193, %s32, 0
          %s195 = sadd.s32 %s194, %s192
          %s196 = scalar_lea.vmem %s4, %s195
          %s197 = sld [smem:[#allocation3 + %s33]]
        $region28: #{tpu_custom_call.1} parent=15 // pred_fallthru
          _
      $region16: #{tpu_custom_call.1} parent=5 // pred_fallthru
        _
      %p198 = scmp.le.s32.totalorder 1, %s25
      %p199 = scmp.lt.s32.totalorder %s25, 6
      %p200 = pnand %p198, %p199
      %p201 = pneg %p200
      // Predicated region
      $region29: #{tpu_custom_call.1} parent=5 // pred_check
        _
      $region30: #{tpu_custom_call.1} parent=5 // pred_check_branch
        %203 = sbr.rel (%p200) target = $region32
      $region31: #{tpu_custom_call.1} parent=5 // pred_region
        %s204 = ssub.s32 %s25, 1
        %p205 = scmp.lt.s32.totalorder %s35, 4
        %s206 = scalar_select %p205, %s35, 4
        %s207 = smul.addr %s206, 8
        %s208 = scalar_lea.vmem %s2, %s207
        %p209 = pneg %p63
        %p210 = pneg %p60
        %s211 = sld [smem:[#allocation3 + %s35]]
        %p212 = scmp.lt.s32.totalorder %s211, 1
        %s213 = scalar_select %p212, %s211, 1
        %p214 = scmp.lt.s32.totalorder %s34, 0
        %s215 = scalar_select %p214, %s34, 0
        %s216 = sadd.s32 %s215, %s213
        %s217 = smul.addr %s216, 4
        %s218 = scalar_lea.vmem %s3, %s217
        %p219 = pneg %p93
        %p220 = pneg %p90
        %s221 = sld [smem:[#allocation3 + %s35]]
        %p222 = scmp.lt.s32.totalorder %s221, 1
        %s223 = scalar_select %p222, %s221, 1
        %p224 = scmp.lt.s32.totalorder %s34, 0
        %s225 = scalar_select %p224, %s34, 0
        %s226 = sadd.s32 %s225, %s223
        %s227 = scalar_lea.vmem %s4, %s226
        %p228 = pneg %p123
        %p229 = pneg %p120
        %p230 = pneg %p149
        %p231 = pneg %p146
        %p232 = scmp.lt.s32.totalorder %s35, 4
        %s233 = scalar_select %p232, %s35, 4
        %s234 = smul.addr %s233, 8
        %s235 = scalar_lea.vmem %s2, %s234
        %s236 = sld [smem:[#allocation3 + %s35]]
        %p237 = scmp.lt.s32.totalorder %s236, 1
        %s238 = scalar_select %p237, %s236, 1
        %p239 = scmp.lt.s32.totalorder %s34, 0
        %s240 = scalar_select %p239, %s34, 0
        %s241 = sadd.s32 %s240, %s238
        %s242 = smul.addr %s241, 4
        %s243 = scalar_lea.vmem %s3, %s242
        %s244 = sld [smem:[#allocation3 + %s35]]
        %s245 = sld [smem:[#allocation3 + %s35]]
        %p246 = scmp.lt.s32.totalorder %s245, 1
        %s247 = scalar_select %p246, %s245, 1
        %p248 = scmp.lt.s32.totalorder %s34, 0
        %s249 = scalar_select %p248, %s34, 0
        %s250 = sadd.s32 %s249, %s247
        %s251 = scalar_lea.vmem %s4, %s250
        %s252 = sld [smem:[#allocation3 + %s35]]
        %p253 = scmp.eq.s32.totalorder %s35, 0
        // Predicated region
        $region33: #{tpu_custom_call.1} parent=31 // pred_check
          %p254 = pneg %p253
        $region34: #{tpu_custom_call.1} parent=31 // pred_check_branch
          %256 = sbr.rel (%p254) target = $region36
        $region35: #{tpu_custom_call.1} parent=31 // pred_region
          %257 = vst [vmem:[#allocation5] sm:$0x3] 0.0
          %258 = vst [vmem:[#allocation5 + $0x2] sm:$0x3] 0.0
        $region36: #{tpu_custom_call.1} parent=31 // pred_fallthru
          _
        %s259 = sld [smem:[#allocation3 + %s35]]
        %s260 = sld [smem:[#allocation4 + %s35]]
        %v261 = vld [vmem:[%s235] sm:$0xff]
        %v262 = vld [vmem:[%s243] sm:$0xf]
        %v263 = vld [vmem:[%s251] sm:$0x1]
        %v265 = vperm.slane %v263, 0
        %vm267 = vcmask 31744
        %v269 = vsel %vm267, %v261, 0
        %vm271 = vcmask 1043456
        %v273 = vsel %vm271, %v262, 0
        %275 = vmatpush.msra.mxu0 0.0
        %276 = vmatpush.msra.mxu0 0.0
        %277 = vmatpush.msra.mxu0 0.0
        %278 = vmatpush.msra.mxu0 0.0
        %279 = vmatpush.msra.mxu0 0.0
        %280 = vmatpush.msra.mxu0 0.0
        %281 = vmatpush.msra.mxu0 0.0
        %282 = vmatpush.msra.mxu0 0.0
        %283 = vmatpush.msra.mxu0 0.0
        %284 = vmatpush.msra.mxu0 0.0
        %285 = vmatpush.msra.mxu0 0.0
        %286 = vmatpush.msra.mxu0 0.0
        %287 = vmatpush.msra.mxu0 0.0
        %288 = vmatpush.msra.mxu0 0.0
        %289 = vmatpush.msra.mxu0 0.0
        %290 = vmatpush.msra.mxu0 %v273
        %291 = vmatmul.f32.gmra.mxu0 %v269
        %v292 = vpop.f32.mrf.mxu0
        %v293 = vadd.f32 %v265, %v292
        %294 = vdwg.mxu0
        %v295 = vlaneseq
        %v296 = vshrl.u32 %v295, 7
        %v297 = vstv %s260
        %vm298 = vcmp.lt.s32.totalorder %v296, %v297
        %v299 = vsel %vm298, %v293, 0.0
        %v300 = vrot.slane %v299, 4
        %v301 = vadd.f32 %v299, %v300
        %v302 = vrot.slane %v301, 2
        %v303 = vadd.f32 %v301, %v302
        %v304 = vrot.slane %v303, 1
        %v305 = vadd.f32 %v303, %v304
        %v306 = vmul.f32 %v299, %v299
        %v307 = vrot.slane %v306, 4
        %v308 = vadd.f32 %v306, %v307
        %v309 = vrot.slane %v308, 2
        %v310 = vadd.f32 %v308, %v309
        %v311 = vrot.slane %v310, 1
        %v312 = vadd.f32 %v310, %v311
        %vm313 = vcmask 1040384
        %v314 = vsel %vm313, %v305, %v312
        %p315 = scmp.eq.s32.totalorder %s259, 0
        // Predicated region
        $region37: #{tpu_custom_call.1} parent=31 // pred_check
          %p316 = pneg %p315
        $region38: #{tpu_custom_call.1} parent=31 // pred_check_branch
          %318 = sbr.rel (%p316) target = $region40
        $region39: #{tpu_custom_call.1} parent=31 // pred_region
          %v319 = vld [vmem:[#allocation5] sm:$0x3]
          %v320 = vadd.f32 %v319, %v314
          %321 = vst [vmem:[#allocation5] sm:$0x3] %v320
        $region40: #{tpu_custom_call.1} parent=31 // pred_fallthru
          _
        %p322 = scmp.ne.s32.totalorder %s259, 0
        // Predicated region
        $region41: #{tpu_custom_call.1} parent=31 // pred_check
          %p323 = pneg %p322
        $region42: #{tpu_custom_call.1} parent=31 // pred_check_branch
          %325 = sbr.rel (%p323) target = $region44
        $region43: #{tpu_custom_call.1} parent=31 // pred_region
          %s326 = scalar_lea.vmem [#allocation5], 2
          %v327 = vld [vmem:[%s326] sm:$0x3]
          %v328 = vadd.f32 %v327, %v314
          %329 = vst [vmem:[%s326] sm:$0x3] %v328
        $region44: #{tpu_custom_call.1} parent=31 // pred_fallthru
          _
        // Predicated region
        $region45: #{tpu_custom_call.1} parent=31 // pred_check
          %p330 = pneg %p146
        $region46: #{tpu_custom_call.1} parent=31 // pred_check_branch
          %332 = sbr.rel (%p330) target = $region48
        $region47: #{tpu_custom_call.1} parent=31 // pred_region
          %334 = vsyncadd [#allocation6], 0
          %s335 = smul.addr %s34, 2
          %s336 = scalar_lea.hbm %s5, %s335
          %s337 = sshll.u32 [#allocation5], 4
          %s338 = int_to_ptr.vmem [resolvable:$true] %s337
          %s339 = sshll.u32 %s336, 4
          %s340 = int_to_ptr.hbm [resolvable:$true] %s339
          %345 = dma.vmem_to_hbm [thread:$0]  %s338, 64, %s340, [#allocation6], 32, 32, 2
        $region48: #{tpu_custom_call.1} parent=31 // pred_fallthru
          _
        // Predicated region
        $region49: #{tpu_custom_call.1} parent=31 // pred_check
          %p346 = pneg %p146
        $region50: #{tpu_custom_call.1} parent=31 // pred_check_branch
          %348 = sbr.rel (%p346) target = $region52
        $region51: #{tpu_custom_call.1} parent=31 // pred_region
          %350 = dma.done [#allocation6], 64
        $region52: #{tpu_custom_call.1} parent=31 // pred_fallthru
          _
      $region32: #{tpu_custom_call.1} parent=5 // pred_fallthru
        _
      %p351 = scmp.le.s32.totalorder 2, %s25
      // Predicated region
      $region53: #{tpu_custom_call.1} parent=5 // pred_check
        %p352 = pneg %p351
      $region54: #{tpu_custom_call.1} parent=5 // pred_check_branch
        %354 = sbr.rel (%p352) target = $region56
      $region55: #{tpu_custom_call.1} parent=5 // pred_region
        %s355 = ssub.s32 %s25, 2
      $region56: #{tpu_custom_call.1} parent=5 // pred_fallthru
        _
    $region6: #{tpu_custom_call.1} parent=1 // loop_footer
      %s29 = sadd.s32 1, %s25
    $region7: #{tpu_custom_call.1} parent=1 // loop_footer_branch
      %24 = sbr.rel target = $region3
    $region8: #{tpu_custom_call.1} parent=1 // loop_exit
      _
    %356 = vsyncpa [#allocation6], 1
    %s357 = scalar_lea.sflag [#allocation6], 1
    %358 = vsyncpa %s357, 1

</llo_original>
